<compile_context>
chip_gen: v7x
topology: tpu7x:2x2x1
jax: 0.10.0
libtpu: 0.0.40
codegen_flags: <defaults>
</compile_context>

<pallas_src>
import jax
import jax.numpy as jnp
from jax.experimental import pallas as pl
from jax.experimental.pallas import tpu as pltpu


def _round_up(v: int, m: int) -> int:
    return ((v + m - 1) // m) * m


def _make_fvsbn_kernel(tkn: int, d_actual: int, d_padded: int):
    """FVSBN kernel; grid = (batch_tile i, flattened upper-triangle step t)."""

    def kernel(n_ids_ref, k_ids_ref, x_ref, wt_ref, b_ref, out_ref, acc_ref):
        # n_ids_ref/k_ids_ref: (nt,) int32 SMEM — flattened (n, k) with k <= n.
        # x_ref  : (tb, tkn)  bf16 — x[:, k*tkn:(k+1)*tkn] block (pipelined).
        # wt_ref : (tkn, tkn) bf16 — block (k, n) of W.T (strictly upper-tri).
        # b_ref  : (1, tkn)   f32  — bias block n.
        # out_ref: (tb, 1)    f32  — per-row log-likelihood (revisited over t).
        # acc_ref: (tb, tkn)  f32  — logits accumulator over k (VMEM scratch).
        t = pl.program_id(1)
        n = n_ids_ref[t]
        k = k_ids_ref[t]

        @pl.when(t == 0)
        def _init_out():
            out_ref[...] = jnp.zeros_like(out_ref)

        @pl.when(k == 0)
        def _init_acc():
            acc_ref[...] = jnp.zeros_like(acc_ref)

        # Only (k <= n) steps exist in the flattened grid, so every step does
        # real MXU work: bf16 operands, f32 accumulation.
        acc_ref[...] += jnp.dot(x_ref[...], wt_ref[...],
                                preferred_element_type=jnp.float32)

        # Diagonal step k == n is the last accumulation for this n block; the
        # pipelined x block here is exactly x[:, n*tkn:(n+1)*tkn], which the
        # log-likelihood needs, so no extra x fetch is required.
        @pl.when(k == n)
        def _epilogue():
            logits = acc_ref[...] + b_ref[...]
            # log(sigmoid(z)) = min(z, 0) - log1p(exp(-|z|))  (stable, fused).
            log_mean = jnp.minimum(logits, 0.0) - jnp.log1p(
                jnp.exp(-jnp.abs(logits)))
            xf = x_ref[...].astype(jnp.float32)            # 0/1 values -> exact
            # Reproduces the PyTorch module verbatim, including (1 - log_mean)
            # (the reference uses 1 - log(mean), not log(1 - mean)).
            ll = xf * log_mean + (1.0 - xf) * (1.0 - log_mean)
            if d_actual != d_padded:                        # mask padded columns
                col = jax.lax.broadcasted_iota(jnp.int32, (1, tkn), 1) + n * tkn
                ll = jnp.where(col < d_actual, ll, 0.0)
            out_ref[...] += jnp.sum(ll, axis=1, keepdims=True)

    return kernel


@jax.jit
def fvsbn_forward(x, w, b):
    """x: (B, D) float; w: (D, D) masked weight; b: (D,) bias. Returns (B,) f32."""
    B, D = x.shape

    # Lane-align D.  256-wide tiles are native on v6e/v7x MXUs and halve the
    # diagonal-block waste vs 512; fall back to 128 when 256 doesn't divide.
    d_pad = _round_up(max(D, 128), 128)
    tkn = 256 if d_pad % 256 == 0 else 128

    # Batch tile: with x K-sliced, per-tile VMEM is tiny, so grow tb as far as
    # the batch allows (cap 1024) to push arithmetic intensity (~tb FLOPs per
    # weight byte) above the HBM ridge on v5e/v6e/v7x.
    tb = min(1024, _round_up(max(B, 1), 128))
    # v7x has two TensorCores per chip: if the whole batch fits one tile, split
    # it so the 'parallel' batch axis gives both cores work.  Best-effort query;
    # on v5e/v6e this is a no-op.
    try:
        is_v7 = "v7" in jax.devices()[0].device_kind.lower()
    except Exception:
        is_v7 = False
    if is_v7 and tb >= 256 and _round_up(B, tb) == tb:
        tb //= 2
    b_pad = _round_up(max(B, 1), tb)

    # bf16 matmul operands (x is 0/1 so exact); bias stays f32.  Under jit the
    # transpose + padding fuse and are cached per shape.
    x_p = jnp.zeros((b_pad, d_pad), jnp.bfloat16).at[:B, :D].set(
        x.astype(jnp.bfloat16))
    wt_p = jnp.zeros((d_pad, d_pad), jnp.bfloat16).at[:D, :D].set(
        w.T.astype(jnp.bfloat16))
    b_p = jnp.zeros((1, d_pad), jnp.float32).at[0, :D].set(
        b.astype(jnp.float32))

    # Flatten the (n, k) triangle (k <= n, since W.T is strictly upper
    # triangular) into one grid axis; scalar-prefetched tables drive all
    # index_maps, so no grid step is spent on all-zero weight blocks.
    nb, nn = b_pad // tb, d_pad // tkn
    n_list, k_list = [], []
    for n in range(nn):
        for k in range(n + 1):
            n_list.append(n)
            k_list.append(k)
    nt = len(n_list)
    n_ids = jnp.asarray(n_list, jnp.int32)
    k_ids = jnp.asarray(k_list, jnp.int32)

    kernel = _make_fvsbn_kernel(tkn=tkn, d_actual=D, d_padded=d_pad)

    # VMEM budget: double-buffered x / W.T / bias / out blocks + acc scratch.
    vmem_need = (2 * tb * tkn * 2 + 2 * tkn * tkn * 2 + 2 * tkn * 4
                 + 2 * tb * 4 + tb * tkn * 4)
    vmem_limit = int(min(48 * 1024 * 1024, max(16 * 1024 * 1024, 2 * vmem_need)))

    out = pl.pallas_call(
        kernel,
        out_shape=jax.ShapeDtypeStruct((b_pad, 1), jnp.float32),
        grid_spec=pltpu.PrefetchScalarGridSpec(
            num_scalar_prefetch=2,
            grid=(nb, nt),
            in_specs=[
                # x block (i, k): streamed, not resident.
                pl.BlockSpec((tb, tkn), lambda i, t, nid, kid: (i, kid[t])),
                # W.T block (k, n): only k <= n blocks are ever fetched.
                pl.BlockSpec((tkn, tkn), lambda i, t, nid, kid: (kid[t], nid[t])),
                pl.BlockSpec((1, tkn), lambda i, t, nid, kid: (0, nid[t])),
            ],
            out_specs=pl.BlockSpec((tb, 1), lambda i, t, nid, kid: (i, 0)),
            scratch_shapes=[pltpu.VMEM((tb, tkn), jnp.float32)],
        ),
        compiler_params=pltpu.CompilerParams(
            dimension_semantics=("parallel", "arbitrary"),
            vmem_limit_bytes=vmem_limit,
        ),
    )(n_ids, k_ids, x_p, wt_p, b_p)

    return out[:B, 0]


def init_fvsbn_params(key, input_dim):
    """nn.Linear-style init + the autoregressive mask from FVSBN.__init__
    (row i keeps only columns j < i, i.e. strictly lower-triangular weight)."""
    kw, kb = jax.random.split(key)
    bound = 1.0 / jnp.sqrt(jnp.float32(input_dim))
    w = jax.random.uniform(kw, (input_dim, input_dim), jnp.float32, -bound, bound)
    b = jax.random.uniform(kb, (input_dim,), jnp.float32, -bound, bound)
    rows = jnp.arange(input_dim)[:, None]
    cols = jnp.arange(input_dim)[None, :]
    w = w * (cols < rows).astype(jnp.float32)
    return w, b


def fvsbn_reference(x, w, b):
    """Pure-f32 JAX port of the PyTorch forward (verbatim math)."""
    logits = jnp.dot(x, w.T, precision=jax.lax.Precision.HIGHEST) + b
    mean = jax.nn.sigmoid(logits)
    log_mean = jnp.log(mean)
    ll = x * log_mean + (1.0 - x) * (1.0 - log_mean)
    return jnp.sum(ll, axis=1)


def fvsbn_reference_bf16_operands(x, w, b):
    """Same math, with matmul operands rounded to bf16 exactly like the kernel
    (bf16 MXU inputs, f32 accumulation) and the same stable log-sigmoid, so the
    kernel can be checked against it with a tight tolerance."""
    xb = x.astype(jnp.bfloat16).astype(jnp.float32)
    wb = w.astype(jnp.bfloat16).astype(jnp.float32)
    logits = jnp.dot(xb, wb.T, precision=jax.lax.Precision.HIGHEST) + b
    log_mean = jnp.minimum(logits, 0.0) - jnp.log1p(jnp.exp(-jnp.abs(logits)))
    ll = x * log_mean + (1.0 - x) * (1.0 - log_mean)
    return jnp.sum(ll, axis=1)


if __name__ == "__main__":
    key = jax.random.PRNGKey(0)
    kx, kp, kx2, kp2 = jax.random.split(key, 4)

    # Small shapes consistent with the module: binary inputs, D features.
    B, D = 8, 16
    x = jax.random.bernoulli(kx, 0.5, (B, D)).astype(jnp.float32)
    w, b = init_fvsbn_params(kp, D)

    out = jax.block_until_ready(fvsbn_forward(x, w, b))
    assert out.shape == (B,)

    # Tight check vs. a reference using the same bf16-rounded matmul operands.
    ref_tight = fvsbn_reference_bf16_operands(x, w, b)
    assert jnp.allclose(out, ref_tight, atol=1e-4, rtol=1e-4), (out, ref_tight)
    # Looser check vs. the pure-f32 module reference (bounds bf16 weight rounding).
    ref_f32 = fvsbn_reference(x, w, b)
    assert jnp.allclose(out, ref_f32, atol=0.15, rtol=0.05), (out, ref_f32)

    # Second shape exercises the multi-block path: flattened-triangle grid,
    # several K/N blocks, diagonal epilogues and the padded-column mask.
    B2, D2 = 300, 300
    x2 = jax.random.bernoulli(kx2, 0.5, (B2, D2)).astype(jnp.float32)
    w2, b2 = init_fvsbn_params(kp2, D2)
    out2 = jax.block_until_ready(fvsbn_forward(x2, w2, b2))
    ref2 = fvsbn_reference_bf16_operands(x2, w2, b2)
    assert out2.shape == (B2,)
    assert jnp.allclose(out2, ref2, atol=1e-3, rtol=1e-3), float(
        jnp.max(jnp.abs(out2 - ref2)))

    # TODO(synk): FVSBN.sample (sequential per-dim autoregressive sampling) is
    # inherently serial and is not implemented as a Pallas kernel.
    print("KERNEL_OK")
</pallas_src>

<mosaic_0001>
module attributes {stable_mosaic.version = 11 : i64} {
  func.func @kernel(%arg0: i32, %arg1: i32, %arg2: memref<1xi32, #tpu.memory_space<smem>>, %arg3: memref<1xi32, #tpu.memory_space<smem>>, %arg4: memref<128x128xbf16, #tpu.memory_space<vmem>>, %arg5: memref<128x128xbf16, #tpu.memory_space<vmem>>, %arg6: memref<1x128xf32, #tpu.memory_space<vmem>>, %arg7: memref<128x1xf32, #tpu.memory_space<vmem>>, %arg8: memref<128x128xf32, #tpu.memory_space<vmem>>) attributes {dimension_semantics = [#tpu.dimension_semantics<parallel>, #tpu.dimension_semantics<arbitrary>], iteration_bounds = array<i64: 1, 1>, scalar_prefetch = 2 : i64, scratch_operands = 1 : i64, tpu.core_type = #tpu.core_type<tc>, window_params = [{transform_indices = @transform_0, window_bounds = array<i64: 128, 128>}, {transform_indices = @transform_1, window_bounds = array<i64: 128, 128>}, {transform_indices = @transform_2, window_bounds = array<i64: 1, 128>}, {transform_indices = @transform_3, window_bounds = array<i64: 128, 1>}]} {
    %0 = arith.index_cast %arg1 : i32 to index
    %1 = memref.load %arg2[%0] : memref<1xi32, #tpu.memory_space<smem>>
    %2 = arith.index_cast %arg1 : i32 to index
    %3 = memref.load %arg3[%2] : memref<1xi32, #tpu.memory_space<smem>>
    %c0_i32 = arith.constant 0 : i32
    %4 = arith.cmpi eq, %arg1, %c0_i32 : i32
    %5 = arith.extui %4 : i1 to i32
    %c0_i32_0 = arith.constant 0 : i32
    %6 = arith.cmpi ne, %5, %c0_i32_0 : i32
    scf.if %6 {
      %cst_11 = arith.constant 0.000000e+00 : f32
      %19 = vector.broadcast %cst_11 : f32 to vector<128x1xf32>
      %c0_12 = arith.constant 0 : index
      %c0_13 = arith.constant 0 : index
      %20 = vector.load %arg7[%c0_12, %c0_13] : memref<128x1xf32, #tpu.memory_space<vmem>>, vector<128x1xf32>
      tpu.vector_store %arg7[%c0_12, %c0_13], %19 {strides = array<i32>} : memref<128x1xf32, #tpu.memory_space<vmem>>, vector<128x1xf32>,
    } else {
    }
    %c0_i32_1 = arith.constant 0 : i32
    %7 = arith.cmpi eq, %3, %c0_i32_1 : i32
    %8 = arith.extui %7 : i1 to i32
    %c0_i32_2 = arith.constant 0 : i32
    %9 = arith.cmpi ne, %8, %c0_i32_2 : i32
    scf.if %9 {
      %cst_11 = arith.constant 0.000000e+00 : f32
      %19 = vector.broadcast %cst_11 : f32 to vector<128x128xf32>
      %c0_12 = arith.constant 0 : index
      %c0_13 = arith.constant 0 : index
      %20 = vector.load %arg8[%c0_12, %c0_13] : memref<128x128xf32, #tpu.memory_space<vmem>>, vector<128x128xf32>
      tpu.vector_store %arg8[%c0_12, %c0_13], %19 {strides = array<i32>} : memref<128x128xf32, #tpu.memory_space<vmem>>, vector<128x128xf32>,
    } else {
    }
    %c0 = arith.constant 0 : index
    %c0_3 = arith.constant 0 : index
    %10 = vector.load %arg8[%c0, %c0_3] : memref<128x128xf32, #tpu.memory_space<vmem>>, vector<128x128xf32>
    %c0_4 = arith.constant 0 : index
    %c0_5 = arith.constant 0 : index
    %11 = vector.load %arg4[%c0_4, %c0_5] : memref<128x128xbf16, #tpu.memory_space<vmem>>, vector<128x128xbf16>
    %c0_6 = arith.constant 0 : index
    %c0_7 = arith.constant 0 : index
    %12 = vector.load %arg5[%c0_6, %c0_7] : memref<128x128xbf16, #tpu.memory_space<vmem>>, vector<128x128xbf16>
    %cst = arith.constant dense<0.000000e+00> : vector<128x128xf32>
    %13 = tpu.matmul %11, %12, %cst {dimension_numbers = #tpu.dot_dimension_numbers<[1], [0], [0], [1], [0, 0, 1, 1], [], []>} : vector<128x128xbf16>, vector<128x128xbf16>, vector<128x128xf32> -> vector<128x128xf32>
    %14 = arith.addf %10, %13 : vector<128x128xf32>
    %c0_8 = arith.constant 0 : index
    %c0_9 = arith.constant 0 : index
    %15 = vector.load %arg8[%c0_8, %c0_9] : memref<128x128xf32, #tpu.memory_space<vmem>>, vector<128x128xf32>
    tpu.vector_store %arg8[%c0_8, %c0_9], %14 {strides = array<i32>} : memref<128x128xf32, #tpu.memory_space<vmem>>, vector<128x128xf32>,
    %16 = arith.cmpi eq, %3, %1 : i32
    %17 = arith.extui %16 : i1 to i32
    %c0_i32_10 = arith.constant 0 : i32
    %18 = arith.cmpi ne, %17, %c0_i32_10 : i32
    scf.if %18 {
      %c0_11 = arith.constant 0 : index
      %c0_12 = arith.constant 0 : index
      %19 = vector.load %arg8[%c0_11, %c0_12] : memref<128x128xf32, #tpu.memory_space<vmem>>, vector<128x128xf32>
      %c0_13 = arith.constant 0 : index
      %c0_14 = arith.constant 0 : index
      %20 = vector.load %arg6[%c0_13, %c0_14] : memref<1x128xf32, #tpu.memory_space<vmem>>, vector<1x128xf32>
      %21 = vector.broadcast %20 : vector<1x128xf32> to vector<128x128xf32>
      %22 = arith.addf %19, %21 : vector<128x128xf32>
      %cst_15 = arith.constant 0.000000e+00 : f32
      %23 = vector.broadcast %cst_15 : f32 to vector<128x128xf32>
      %24 = arith.minimumf %22, %23 : vector<128x128xf32>
      %25 = math.absf %22 : vector<128x128xf32>
      %cst_16 = arith.constant 0.000000e+00 : f32
      %26 = vector.broadcast %cst_16 : f32 to vector<128x128xf32>
      %27 = arith.subf %26, %25 : vector<128x128xf32>
      %28 = math.exp %27 : vector<128x128xf32>
      %29 = math.log1p %28 : vector<128x128xf32>
      %30 = arith.subf %24, %29 : vector<128x128xf32>
      %c0_17 = arith.constant 0 : index
      %c0_18 = arith.constant 0 : index
      %31 = vector.load %arg4[%c0_17, %c0_18] : memref<128x128xbf16, #tpu.memory_space<vmem>>, vector<128x128xbf16>
      %32 = arith.extf %31 : vector<128x128xbf16> to vector<128x128xf32>
      %33 = arith.mulf %32, %30 : vector<128x128xf32>
      %cst_19 = arith.constant 1.000000e+00 : f32
      %34 = vector.broadcast %cst_19 : f32 to vector<128x128xf32>
      %35 = arith.subf %34, %32 : vector<128x128xf32>
      %cst_20 = arith.constant 1.000000e+00 : f32
      %36 = vector.broadcast %cst_20 : f32 to vector<128x128xf32>
      %37 = arith.subf %36, %30 : vector<128x128xf32>
      %38 = arith.mulf %35, %37 : vector<128x128xf32>
      %39 = arith.addf %33, %38 : vector<128x128xf32>
      %40 = tpu.iota {dimensions = array<i32: 1>} : vector<1x128xi32>
      %c128_i32 = arith.constant 128 : i32
      %41 = arith.muli %1, %c128_i32 : i32
      %42 = vector.broadcast %41 : i32 to vector<1x128xi32>
      %43 = arith.addi %40, %42 : vector<1x128xi32>
      %c16_i32 = arith.constant 16 : i32
      %44 = vector.broadcast %c16_i32 : i32 to vector<1x128xi32>
      %45 = arith.cmpi slt, %43, %44 : vector<1x128xi32>
      %cst_21 = arith.constant 0.000000e+00 : f32
      %46 = vector.shape_cast %45 : vector<1x128xi1> to vector<1x128xi1>
      %47 = vector.broadcast %46 : vector<1x128xi1> to vector<128x128xi1>
      %48 = vector.broadcast %cst_21 : f32 to vector<128x128xf32>
      %49 = arith.select %47, %39, %48 : vector<128x128xi1>, vector<128x128xf32>
      %c0_22 = arith.constant 0 : index
      %c0_23 = arith.constant 0 : index
      %50 = vector.load %arg7[%c0_22, %c0_23] : memref<128x1xf32, #tpu.memory_space<vmem>>, vector<128x1xf32>
      %cst_24 = arith.constant dense<0.000000e+00> : vector<128xf32>
      %51 = vector.multi_reduction <add>, %49, %cst_24 [1] : vector<128x128xf32> to vector<128xf32>
      %52 = vector.shape_cast %51 : vector<128xf32> to vector<128x1xf32>
      %53 = arith.addf %50, %52 : vector<128x1xf32>
      %c0_25 = arith.constant 0 : index
      %c0_26 = arith.constant 0 : index
      %54 = vector.load %arg7[%c0_25, %c0_26] : memref<128x1xf32, #tpu.memory_space<vmem>>, vector<128x1xf32>
      tpu.vector_store %arg7[%c0_25, %c0_26], %53 {strides = array<i32>} : memref<128x1xf32, #tpu.memory_space<vmem>>, vector<128x1xf32>,
    } else {
    }
    return
  }
  func.func @transform_0(%arg0: i32, %arg1: i32, %arg2: memref<1xi32, #tpu.memory_space<smem>>, %arg3: memref<1xi32, #tpu.memory_space<smem>>) -> (i32, i32) {
    %0 = arith.index_cast %arg1 : i32 to index
    %1 = memref.load %arg3[%0] : memref<1xi32, #tpu.memory_space<smem>>
    %c0_i32 = arith.constant 0 : i32
    return %arg0, %1 : i32, i32
  }
  func.func @transform_1(%arg0: i32, %arg1: i32, %arg2: memref<1xi32, #tpu.memory_space<smem>>, %arg3: memref<1xi32, #tpu.memory_space<smem>>) -> (i32, i32) {
    %0 = arith.index_cast %arg1 : i32 to index
    %1 = memref.load %arg3[%0] : memref<1xi32, #tpu.memory_space<smem>>
    %2 = arith.index_cast %arg1 : i32 to index
    %3 = memref.load %arg2[%2] : memref<1xi32, #tpu.memory_space<smem>>
    %c0_i32 = arith.constant 0 : i32
    return %1, %3 : i32, i32
  }
  func.func @transform_2(%arg0: i32, %arg1: i32, %arg2: memref<1xi32, #tpu.memory_space<smem>>, %arg3: memref<1xi32, #tpu.memory_space<smem>>) -> (i32, i32) {
    %0 = arith.index_cast %arg1 : i32 to index
    %1 = memref.load %arg2[%0] : memref<1xi32, #tpu.memory_space<smem>>
    %c0_i32 = arith.constant 0 : i32
    %c0_i32_0 = arith.constant 0 : i32
    return %c0_i32, %1 : i32, i32
  }
  func.func @transform_3(%arg0: i32, %arg1: i32, %arg2: memref<1xi32, #tpu.memory_space<smem>>, %arg3: memref<1xi32, #tpu.memory_space<smem>>) -> (i32, i32) {
    %c0_i32 = arith.constant 0 : i32
    %c0_i32_0 = arith.constant 0 : i32
    return %arg0, %c0_i32 : i32, i32
  }
}

</mosaic_0001>

<llo_original>
// kernel: fvsbn_forward.1
$region0: #{fvsbn_forward.1}
  #allocation0 [shape = 'u32[]', space=smem, size = 0x4, offset = 0x4, fixed_abs, tag = 'smem constant byte address 0x4 - core index']
  #allocation1 [shape = 'u32[144,128]{1,0:T(1,128)}', space=vmem, size = 0x12000, scoped, tag = 'internal scratch']
  #allocation2 [shape = 'f32[128,128]{1,0:T(8,128)}', space=vmem, size = 0x10000, scoped, tag = 'scratch operand']
  #allocation3 [shape = 's32[1]{0}', space=sflag, size = 0x4, scoped, tag = 'scoped memory for fvsbn_forward.1']
  #allocation4 [shape = 's32[1]{0:T(128)S(6)}', space=smem, size = 0x200, scoped, tag = 'prefetched SMEM operand 0']
  #allocation5 [shape = 's32[1]{0:T(128)S(6)}', space=smem, size = 0x200, scoped, tag = 'prefetched SMEM operand 1']
  %s0 = inlined_call_operand.<no memory space> [shape: s32[1], index: 0, kind: input, shape index: {}, may-alias: {0,1}]
  %s1 = inlined_call_operand.<no memory space> [shape: s32[1], index: 1, kind: input, shape index: {}, may-alias: {0,1}]
  %s2 = inlined_call_operand.vmem [shape: bf16[128,128], index: 2, kind: input, shape index: {}]
  %s3 = inlined_call_operand.vmem [shape: bf16[128,128], index: 3, kind: input, shape index: {}]
  %s4 = inlined_call_operand.vmem [shape: f32[1,128], index: 4, kind: input, shape index: {}]
  %s5 = inlined_call_operand.vmem [shape: f32[128,1], index: 5, kind: output, shape index: {}]
  %s6 = sld [smem:[#allocation0]]
  $region34: #{fvsbn_forward.1} parent=0
    _
  %s8 = ssub.s32 1, %s6
  %s9 = scalar_select 0, %s8, %s6
  %10 = sst [smem:[#allocation4]] %s0
  %11 = sst [smem:[#allocation5]] %s1
  // Predicated region
  $region2: #{fvsbn_forward.1} parent=0 // pred_check
    _
  $region3: #{fvsbn_forward.1} parent=0 // pred_check_branch
    %13 = sbr.rel (0) target = $region5
  $region4: #{fvsbn_forward.1} parent=0 // pred_region
    %s14 = sld [smem:[#allocation5]]
    %p15 = scmp.lt.s32.totalorder %s14, 0
    %s16 = scalar_select %p15, %s14, 0
    %s17 = smul.addr %s16, 4
    %s18 = scalar_lea.vmem %s2, %s17
    %s19 = sld [smem:[#allocation5]]
  $region5: #{fvsbn_forward.1} parent=0 // pred_fallthru
    _
  // Predicated region
  $region6: #{fvsbn_forward.1} parent=0 // pred_check
    _
  $region7: #{fvsbn_forward.1} parent=0 // pred_check_branch
    %21 = sbr.rel (0) target = $region9
  $region8: #{fvsbn_forward.1} parent=0 // pred_region
    %s22 = sld [smem:[#allocation5]]
    %s23 = sld [smem:[#allocation4]]
    %s24 = smul.u32 16, %s22
    %p25 = scmp.lt.s32.totalorder %s24, 15
    %s26 = scalar_select %p25, %s24, 15
    %p27 = scmp.lt.s32.totalorder %s23, 0
    %s28 = scalar_select %p27, %s23, 0
    %s29 = sadd.s32 %s28, %s26
    %s30 = smul.addr %s29, 4
    %s31 = scalar_lea.vmem %s3, %s30
    %s32 = sld [smem:[#allocation5]]
    %s33 = sld [smem:[#allocation4]]
    %s34 = smul.u32 16, %s32
  $region9: #{fvsbn_forward.1} parent=0 // pred_fallthru
    _
  // Predicated region
  $region10: #{fvsbn_forward.1} parent=0 // pred_check
    _
  $region11: #{fvsbn_forward.1} parent=0 // pred_check_branch
    %36 = sbr.rel (0) target = $region13
  $region12: #{fvsbn_forward.1} parent=0 // pred_region
    %s37 = sld [smem:[#allocation4]]
    %p38 = scmp.lt.s32.totalorder %s37, 0
    %s39 = scalar_select %p38, %s37, 0
    %s40 = scalar_lea.vmem %s4, %s39
    %s41 = sld [smem:[#allocation4]]
  $region13: #{fvsbn_forward.1} parent=0 // pred_fallthru
    _
  %s42 = sld [smem:[#allocation5]]
  %p43 = scmp.lt.s32.totalorder %s42, 0
  %s44 = scalar_select %p43, %s42, 0
  %s45 = smul.addr %s44, 4
  %s46 = scalar_lea.vmem %s2, %s45
  %s47 = sld [smem:[#allocation5]]
  %s48 = sld [smem:[#allocation4]]
  %s49 = smul.u32 16, %s47
  %p50 = scmp.lt.s32.totalorder %s49, 15
  %s51 = scalar_select %p50, %s49, 15
  %p52 = scmp.lt.s32.totalorder %s48, 0
  %s53 = scalar_select %p52, %s48, 0
  %s54 = sadd.s32 %s53, %s51
  %s55 = smul.addr %s54, 4
  %s56 = scalar_lea.vmem %s3, %s55
  %s57 = sld [smem:[#allocation4]]
  %p58 = scmp.lt.s32.totalorder %s57, 0
  %s59 = scalar_select %p58, %s57, 0
  %s60 = scalar_lea.vmem %s4, %s59
  %s61 = sld [smem:[#allocation5]]
  %p62 = scmp.lt.s32.totalorder %s61, 0
  %s63 = scalar_select %p62, %s61, 0
  %s64 = smul.addr %s63, 4
  %s65 = scalar_lea.vmem %s2, %s64
  %s66 = sld [smem:[#allocation5]]
  %s67 = sld [smem:[#allocation5]]
  %s68 = sld [smem:[#allocation4]]
  %s69 = smul.u32 16, %s67
  %p70 = scmp.lt.s32.totalorder %s69, 15
  %s71 = scalar_select %p70, %s69, 15
  %p72 = scmp.lt.s32.totalorder %s68, 0
  %s73 = scalar_select %p72, %s68, 0
  %s74 = sadd.s32 %s73, %s71
  %s75 = smul.addr %s74, 4
  %s76 = scalar_lea.vmem %s3, %s75
  %s77 = sld [smem:[#allocation5]]
  %s78 = sld [smem:[#allocation4]]
  %s79 = smul.u32 16, %s77
  %s80 = sld [smem:[#allocation4]]
  %p81 = scmp.lt.s32.totalorder %s80, 0
  %s82 = scalar_select %p81, %s80, 0
  %s83 = scalar_lea.vmem %s4, %s82
  %s84 = sld [smem:[#allocation4]]
  %s86 = sld [smem:[#allocation4]]
  %s87 = sld [smem:[#allocation5]]
  %p88 = scmp.eq.s32.totalorder 0, 0
  // Predicated region
  $region14: #{fvsbn_forward.1} parent=0 // pred_check
    %p89 = pneg %p88
  $region15: #{fvsbn_forward.1} parent=0 // pred_check_branch
    %91 = sbr.rel (%p89) target = $region17
  $region16: #{fvsbn_forward.1} parent=0 // pred_region
    %vm92 = vcmask 7168
    %93 = vst.msk [vmem:[%s5] sm:$0xff] %vm92, 0.0
    %94 = vst.msk [vmem:[%s5 + $0x8] sm:$0xff] %vm92, 0.0
    %95 = vst.msk [vmem:[%s5 + $0x10] sm:$0xff] %vm92, 0.0
    %96 = vst.msk [vmem:[%s5 + $0x18] sm:$0xff] %vm92, 0.0
    %97 = vst.msk [vmem:[%s5 + $0x20] sm:$0xff] %vm92, 0.0
    %98 = vst.msk [vmem:[%s5 + $0x28] sm:$0xff] %vm92, 0.0
    %99 = vst.msk [vmem:[%s5 + $0x30] sm:$0xff] %vm92, 0.0
    %100 = vst.msk [vmem:[%s5 + $0x38] sm:$0xff] %vm92, 0.0
    %101 = vst.msk [vmem:[%s5 + $0x40] sm:$0xff] %vm92, 0.0
    %102 = vst.msk [vmem:[%s5 + $0x48] sm:$0xff] %vm92, 0.0
    %103 = vst.msk [vmem:[%s5 + $0x50] sm:$0xff] %vm92, 0.0
    %104 = vst.msk [vmem:[%s5 + $0x58] sm:$0xff] %vm92, 0.0
    %105 = vst.msk [vmem:[%s5 + $0x60] sm:$0xff] %vm92, 0.0
    %106 = vst.msk [vmem:[%s5 + $0x68] sm:$0xff] %vm92, 0.0
    %107 = vst.msk [vmem:[%s5 + $0x70] sm:$0xff] %vm92, 0.0
    %108 = vst.msk [vmem:[%s5 + $0x78] sm:$0xff] %vm92, 0.0
  $region17: #{fvsbn_forward.1} parent=0 // pred_fallthru
    _
  %p109 = scmp.eq.s32.totalorder %s87, 0
  // Predicated region
  $region18: #{fvsbn_forward.1} parent=0 // pred_check
    %p110 = pneg %p109
  $region19: #{fvsbn_forward.1} parent=0 // pred_check_branch
    %112 = sbr.rel (%p110) target = $region21
  $region20: #{fvsbn_forward.1} parent=0 // pred_region
    %113 = vst [vmem:[#allocation2] sm:$0xff] 0.0
    %114 = vst [vmem:[#allocation2 + $0x8] sm:$0xff] 0.0
    %115 = vst [vmem:[#allocation2 + $0x10] sm:$0xff] 0.0
    %116 = vst [vmem:[#allocation2 + $0x18] sm:$0xff] 0.0
    %117 = vst [vmem:[#allocation2 + $0x20] sm:$0xff] 0.0
    %118 = vst [vmem:[#allocation2 + $0x28] sm:$0xff] 0.0
    %119 = vst [vmem:[#allocation2 + $0x30] sm:$0xff] 0.0
    %120 = vst [vmem:[#allocation2 + $0x38] sm:$0xff] 0.0
    %121 = vst [vmem:[#allocation2 + $0x40] sm:$0xff] 0.0
    %122 = vst [vmem:[#allocation2 + $0x48] sm:$0xff] 0.0
    %123 = vst [vmem:[#allocation2 + $0x50] sm:$0xff] 0.0
    %124 = vst [vmem:[#allocation2 + $0x58] sm:$0xff] 0.0
    %125 = vst [vmem:[#allocation2 + $0x60] sm:$0xff] 0.0
    %126 = vst [vmem:[#allocation2 + $0x68] sm:$0xff] 0.0
    %127 = vst [vmem:[#allocation2 + $0x70] sm:$0xff] 0.0
    %128 = vst [vmem:[#allocation2 + $0x78] sm:$0xff] 0.0
  $region21: #{fvsbn_forward.1} parent=0 // pred_fallthru
    _
  %v129 = vld [vmem:[#allocation2] sm:$0xff]
  %v130 = vld [vmem:[#allocation2 + $0x8] sm:$0xff]
  %v131 = vld [vmem:[#allocation2 + $0x10] sm:$0xff]
  %v132 = vld [vmem:[#allocation2 + $0x18] sm:$0xff]
  %v133 = vld [vmem:[#allocation2 + $0x20] sm:$0xff]
  %v134 = vld [vmem:[#allocation2 + $0x28] sm:$0xff]
  %v135 = vld [vmem:[#allocation2 + $0x30] sm:$0xff]
  %v136 = vld [vmem:[#allocation2 + $0x38] sm:$0xff]
  %v137 = vld [vmem:[#allocation2 + $0x40] sm:$0xff]
  %v138 = vld [vmem:[#allocation2 + $0x48] sm:$0xff]
  %v139 = vld [vmem:[#allocation2 + $0x50] sm:$0xff]
  %v140 = vld [vmem:[#allocation2 + $0x58] sm:$0xff]
  %v141 = vld [vmem:[#allocation2 + $0x60] sm:$0xff]
  %v142 = vld [vmem:[#allocation2 + $0x68] sm:$0xff]
  %v143 = vld [vmem:[#allocation2 + $0x70] sm:$0xff]
  %v144 = vld [vmem:[#allocation2 + $0x78] sm:$0xff]
  %v145 = vld [vmem:[%s65] sm:$0xf]
  %v146 = vld [vmem:[%s65 + $0x4] sm:$0xf]
  %v147 = vld [vmem:[%s65 + $0x8] sm:$0xf]
  %v148 = vld [vmem:[%s65 + $0xc] sm:$0xf]
  %v149 = vld [vmem:[%s65 + $0x10] sm:$0xf]
  %v150 = vld [vmem:[%s65 + $0x14] sm:$0xf]
  %v151 = vld [vmem:[%s65 + $0x18] sm:$0xf]
  %v152 = vld [vmem:[%s65 + $0x1c] sm:$0xf]
  %v153 = vld [vmem:[%s65 + $0x20] sm:$0xf]
  %v154 = vld [vmem:[%s65 + $0x24] sm:$0xf]
  %v155 = vld [vmem:[%s65 + $0x28] sm:$0xf]
  %v156 = vld [vmem:[%s65 + $0x2c] sm:$0xf]
  %v157 = vld [vmem:[%s65 + $0x30] sm:$0xf]
  %v158 = vld [vmem:[%s65 + $0x34] sm:$0xf]
  %v159 = vld [vmem:[%s65 + $0x38] sm:$0xf]
  %v160 = vld [vmem:[%s65 + $0x3c] sm:$0xf]
  %v161 = vld [vmem:[%s76] sm:$0xf]
  %v162 = vld [vmem:[%s76 + $0x4] sm:$0xf]
  %v163 = vld [vmem:[%s76 + $0x8] sm:$0xf]
  %v164 = vld [vmem:[%s76 + $0xc] sm:$0xf]
  %v165 = vld [vmem:[%s76 + $0x10] sm:$0xf]
  %v166 = vld [vmem:[%s76 + $0x14] sm:$0xf]
  %v167 = vld [vmem:[%s76 + $0x18] sm:$0xf]
  %v168 = vld [vmem:[%s76 + $0x1c] sm:$0xf]
  %v169 = vld [vmem:[%s76 + $0x20] sm:$0xf]
  %v170 = vld [vmem:[%s76 + $0x24] sm:$0xf]
  %v171 = vld [vmem:[%s76 + $0x28] sm:$0xf]
  %v172 = vld [vmem:[%s76 + $0x2c] sm:$0xf]
  %v173 = vld [vmem:[%s76 + $0x30] sm:$0xf]
  %v174 = vld [vmem:[%s76 + $0x34] sm:$0xf]
  %v175 = vld [vmem:[%s76 + $0x38] sm:$0xf]
  %v176 = vld [vmem:[%s76 + $0x3c] sm:$0xf]
  %v193 = vunpack.c.l.b16 %v145
  %v194 = vunpack.c.l.b16 %v146
  %v195 = vunpack.c.l.b16 %v147
  %v196 = vunpack.c.l.b16 %v148
  %v197 = vunpack.c.l.b16 %v149
  %v198 = vunpack.c.l.b16 %v150
  %v199 = vunpack.c.l.b16 %v151
  %v200 = vunpack.c.l.b16 %v152
  %v201 = vunpack.c.l.b16 %v153
  %v202 = vunpack.c.l.b16 %v154
  %v203 = vunpack.c.l.b16 %v155
  %v204 = vunpack.c.l.b16 %v156
  %v205 = vunpack.c.l.b16 %v157
  %v206 = vunpack.c.l.b16 %v158
  %v207 = vunpack.c.l.b16 %v159
  %v208 = vunpack.c.l.b16 %v160
  %v209 = vpack.c.b16 %v194, %v193
  %v210 = vpack.c.b16 %v196, %v195
  %v211 = vpack.c.b16 %v198, %v197
  %v212 = vpack.c.b16 %v200, %v199
  %v213 = vpack.c.b16 %v202, %v201
  %v214 = vpack.c.b16 %v204, %v203
  %v215 = vpack.c.b16 %v206, %v205
  %v216 = vpack.c.b16 %v208, %v207
  %v241 = vunpack.c.l.b16 %v161
  %v242 = vunpack.c.l.b16 %v162
  %v243 = vunpack.c.l.b16 %v163
  %v244 = vunpack.c.l.b16 %v164
  %v245 = vunpack.c.l.b16 %v165
  %v246 = vunpack.c.l.b16 %v166
  %v247 = vunpack.c.l.b16 %v167
  %v248 = vunpack.c.l.b16 %v168
  %v249 = vunpack.c.l.b16 %v169
  %v250 = vunpack.c.l.b16 %v170
  %v251 = vunpack.c.l.b16 %v171
  %v252 = vunpack.c.l.b16 %v172
  %v253 = vunpack.c.l.b16 %v173
  %v254 = vunpack.c.l.b16 %v174
  %v255 = vunpack.c.l.b16 %v175
  %v256 = vunpack.c.l.b16 %v176
  %v257 = vpack.c.b16 %v242, %v241
  %v258 = vpack.c.b16 %v244, %v243
  %v259 = vpack.c.b16 %v246, %v245
  %v260 = vpack.c.b16 %v248, %v247
  %v261 = vpack.c.b16 %v250, %v249
  %v262 = vpack.c.b16 %v252, %v251
  %v263 = vpack.c.b16 %v254, %v253
  %v264 = vpack.c.b16 %v256, %v255
  %273 = vmatprep.subr.bf16.mxu0 0
  %274 = vmatpush1.bf16.msra.mxu0 %v257
  %275 = vmatprep.subr.bf16.mxu0 0
  %276 = vmatpush1.bf16.msra.mxu0 %v258
  %277 = vmatprep.subr.bf16.mxu0 0
  %278 = vmatpush1.bf16.msra.mxu0 %v259
  %279 = vmatprep.subr.bf16.mxu0 0
  %280 = vmatpush1.bf16.msra.mxu0 %v260
  %281 = vmatprep.subr.bf16.mxu0 0
  %282 = vmatpush1.bf16.msra.mxu0 %v261
  %283 = vmatprep.subr.bf16.mxu0 0
  %284 = vmatpush1.bf16.msra.mxu0 %v262
  %285 = vmatprep.subr.bf16.mxu0 0
  %286 = vmatpush1.bf16.msra.mxu0 %v263
  %287 = vmatprep.subr.bf16.mxu0 0
  %288 = vmatpush1.bf16.msra.mxu0 %v264
  %289 = vmatprep.subr.bf16.mxu0 0
  %290 = vmatpush1.bf16.msra.mxu0 0
  %291 = vmatprep.subr.bf16.mxu0 0
  %292 = vmatpush1.bf16.msra.mxu0 0
  %293 = vmatprep.subr.bf16.mxu0 0
  %294 = vmatpush1.bf16.msra.mxu0 0
  %295 = vmatprep.subr.bf16.mxu0 0
  %296 = vmatpush1.bf16.msra.mxu0 0
  %297 = vmatprep.subr.bf16.mxu0 0
  %298 = vmatpush1.bf16.msra.mxu0 0
  %299 = vmatprep.subr.bf16.mxu0 0
  %300 = vmatpush1.bf16.msra.mxu0 0
  %301 = vmatprep.subr.bf16.mxu0 0
  %302 = vmatpush1.bf16.msra.mxu0 0
  %303 = vmatprep.subr.bf16.mxu0 0
  %304 = vmatpush1.bf16.msra.mxu0 0
  %305 = vmatprep.mubr.bf16.mxu0 0
  %306 = vmatmul.mubr.bf16.gmra.mrb[0].mxu0 %v209
  %v307 = vpop.f32.mrb[0].mxu0
  %v308 = vadd.f32 0.0, %v307
  %v309 = vpop.f32.mrb[0].mxu0
  %v310 = vpop.f32.mrb[0].mxu0
  %v311 = vadd.f32 0.0, %v310
  %v312 = vpop.f32.mrb[0].mxu0
  %313 = vmatprep.mubr.bf16.mxu0 0
  %314 = vmatmul.mubr.bf16.gmra.mrb[0].mxu0 %v210
  %v315 = vpop.f32.mrb[0].mxu0
  %v316 = vadd.f32 0.0, %v315
  %v317 = vpop.f32.mrb[0].mxu0
  %v318 = vpop.f32.mrb[0].mxu0
  %v319 = vadd.f32 0.0, %v318
  %v320 = vpop.f32.mrb[0].mxu0
  %321 = vmatprep.mubr.bf16.mxu0 0
  %322 = vmatmul.mubr.bf16.gmra.mrb[0].mxu0 %v211
  %v323 = vpop.f32.mrb[0].mxu0
  %v324 = vadd.f32 0.0, %v323
  %v325 = vpop.f32.mrb[0].mxu0
  %v326 = vpop.f32.mrb[0].mxu0
  %v327 = vadd.f32 0.0, %v326
  %v328 = vpop.f32.mrb[0].mxu0
  %329 = vmatprep.mubr.bf16.mxu0 0
  %330 = vmatmul.mubr.bf16.gmra.mrb[0].mxu0 %v212
  %v331 = vpop.f32.mrb[0].mxu0
  %v332 = vadd.f32 0.0, %v331
  %v333 = vpop.f32.mrb[0].mxu0
  %v334 = vpop.f32.mrb[0].mxu0
  %v335 = vadd.f32 0.0, %v334
  %v336 = vpop.f32.mrb[0].mxu0
  %337 = vmatprep.mubr.bf16.mxu0 0
  %338 = vmatmul.mubr.bf16.gmra.mrb[0].mxu0 %v213
  %v339 = vpop.f32.mrb[0].mxu0
  %v340 = vadd.f32 0.0, %v339
  %v341 = vpop.f32.mrb[0].mxu0
  %v342 = vpop.f32.mrb[0].mxu0
  %v343 = vadd.f32 0.0, %v342
  %v344 = vpop.f32.mrb[0].mxu0
  %345 = vmatprep.mubr.bf16.mxu0 0
  %346 = vmatmul.mubr.bf16.gmra.mrb[0].mxu0 %v214
  %v347 = vpop.f32.mrb[0].mxu0
  %v348 = vadd.f32 0.0, %v347
  %v349 = vpop.f32.mrb[0].mxu0
  %v350 = vpop.f32.mrb[0].mxu0
  %v351 = vadd.f32 0.0, %v350
  %v352 = vpop.f32.mrb[0].mxu0
  %353 = vmatprep.mubr.bf16.mxu0 0
  %354 = vmatmul.mubr.bf16.gmra.mrb[0].mxu0 %v215
  %v355 = vpop.f32.mrb[0].mxu0
  %v356 = vadd.f32 0.0, %v355
  %v357 = vpop.f32.mrb[0].mxu0
  %v358 = vpop.f32.mrb[0].mxu0
  %v359 = vadd.f32 0.0, %v358
  %v360 = vpop.f32.mrb[0].mxu0
  %361 = vmatprep.mubr.bf16.mxu0 0
  %362 = vmatmul.mubr.bf16.gmra.mrb[0].mxu0 %v216
  %v363 = vpop.f32.mrb[0].mxu0
  %v364 = vadd.f32 0.0, %v363
  %v365 = vpop.f32.mrb[0].mxu0
  %v366 = vpop.f32.mrb[0].mxu0
  %v367 = vadd.f32 0.0, %v366
  %v368 = vpop.f32.mrb[0].mxu0
  %369 = vdwg.mxu0
  %v370 = vadd.f32 %v129, %v308
  %v371 = vadd.f32 %v130, %v311
  %v372 = vadd.f32 %v131, %v316
  %v373 = vadd.f32 %v132, %v319
  %v374 = vadd.f32 %v133, %v324
  %v375 = vadd.f32 %v134, %v327
  %v376 = vadd.f32 %v135, %v332
  %v377 = vadd.f32 %v136, %v335
  %v378 = vadd.f32 %v137, %v340
  %v379 = vadd.f32 %v138, %v343
  %v380 = vadd.f32 %v139, %v348
  %v381 = vadd.f32 %v140, %v351
  %v382 = vadd.f32 %v141, %v356
  %v383 = vadd.f32 %v142, %v359
  %v384 = vadd.f32 %v143, %v364
  %v385 = vadd.f32 %v144, %v367
  %386 = vst [vmem:[#allocation2] sm:$0xff] %v370
  %387 = vst [vmem:[#allocation2 + $0x8] sm:$0xff] %v371
  %388 = vst [vmem:[#allocation2 + $0x10] sm:$0xff] %v372
  %389 = vst [vmem:[#allocation2 + $0x18] sm:$0xff] %v373
  %390 = vst [vmem:[#allocation2 + $0x20] sm:$0xff] %v374
  %391 = vst [vmem:[#allocation2 + $0x28] sm:$0xff] %v375
  %392 = vst [vmem:[#allocation2 + $0x30] sm:$0xff] %v376
  %393 = vst [vmem:[#allocation2 + $0x38] sm:$0xff] %v377
  %394 = vst [vmem:[#allocation2 + $0x40] sm:$0xff] %v378
  %395 = vst [vmem:[#allocation2 + $0x48] sm:$0xff] %v379
  %396 = vst [vmem:[#allocation2 + $0x50] sm:$0xff] %v380
  %397 = vst [vmem:[#allocation2 + $0x58] sm:$0xff] %v381
  %398 = vst [vmem:[#allocation2 + $0x60] sm:$0xff] %v382
  %399 = vst [vmem:[#allocation2 + $0x68] sm:$0xff] %v383
  %400 = vst [vmem:[#allocation2 + $0x70] sm:$0xff] %v384
  %401 = vst [vmem:[#allocation2 + $0x78] sm:$0xff] %v385
  %p402 = scmp.eq.s32.totalorder %s87, %s86
  // Predicated region
  $region22: #{fvsbn_forward.1} parent=0 // pred_check
    %p403 = pneg %p402
  $region23: #{fvsbn_forward.1} parent=0 // pred_check_branch
    %405 = sbr.rel (%p403) target = $region25
  $region24: #{fvsbn_forward.1} parent=0 // pred_region
    %v406 = vld [vmem:[#allocation2] sm:$0xff]
    %v407 = vld [vmem:[#allocation2 + $0x8] sm:$0xff]
    %v408 = vld [vmem:[#allocation2 + $0x10] sm:$0xff]
    %v409 = vld [vmem:[#allocation2 + $0x18] sm:$0xff]
    %v410 = vld [vmem:[#allocation2 + $0x20] sm:$0xff]
    %v411 = vld [vmem:[#allocation2 + $0x28] sm:$0xff]
    %v412 = vld [vmem:[#allocation2 + $0x30] sm:$0xff]
    %v413 = vld [vmem:[#allocation2 + $0x38] sm:$0xff]
    %v414 = vld [vmem:[#allocation2 + $0x40] sm:$0xff]
    %v415 = vld [vmem:[#allocation2 + $0x48] sm:$0xff]
    %v416 = vld [vmem:[#allocation2 + $0x50] sm:$0xff]
    %v417 = vld [vmem:[#allocation2 + $0x58] sm:$0xff]
    %v418 = vld [vmem:[#allocation2 + $0x60] sm:$0xff]
    %v419 = vld [vmem:[#allocation2 + $0x68] sm:$0xff]
    %v420 = vld [vmem:[#allocation2 + $0x70] sm:$0xff]
    %v421 = vld [vmem:[#allocation2 + $0x78] sm:$0xff]
    %v422 = vld [vmem:[%s83] sm:$0x1]
    %v424 = vlaneseq
    %v425 = vshrl.u32 %v424, 7
    %v426 = vsub.s32 0, %v425
    %v427 = vrot.slane %v422, %v426
    %v429 = vadd.f32 %v406, %v427
    %v430 = vadd.f32 %v407, %v427
    %v431 = vadd.f32 %v408, %v427
    %v432 = vadd.f32 %v409, %v427
    %v433 = vadd.f32 %v410, %v427
    %v434 = vadd.f32 %v411, %v427
    %v435 = vadd.f32 %v412, %v427
    %v436 = vadd.f32 %v413, %v427
    %v437 = vadd.f32 %v414, %v427
    %v438 = vadd.f32 %v415, %v427
    %v439 = vadd.f32 %v416, %v427
    %v440 = vadd.f32 %v417, %v427
    %v441 = vadd.f32 %v418, %v427
    %v442 = vadd.f32 %v419, %v427
    %v443 = vadd.f32 %v420, %v427
    %v444 = vadd.f32 %v421, %v427
    %v445 = vmin.f32 %v429, 0.0
    %v446 = vmin.f32 %v430, 0.0
    %v447 = vmin.f32 %v431, 0.0
    %v448 = vmin.f32 %v432, 0.0
    %v449 = vmin.f32 %v433, 0.0
    %v450 = vmin.f32 %v434, 0.0
    %v451 = vmin.f32 %v435, 0.0
    %v452 = vmin.f32 %v436, 0.0
    %v453 = vmin.f32 %v437, 0.0
    %v454 = vmin.f32 %v438, 0.0
    %v455 = vmin.f32 %v439, 0.0
    %v456 = vmin.f32 %v440, 0.0
    %v457 = vmin.f32 %v441, 0.0
    %v458 = vmin.f32 %v442, 0.0
    %v459 = vmin.f32 %v443, 0.0
    %v460 = vmin.f32 %v444, 0.0
    %v461 = vand.u32 2147483647, %v429
    %v462 = vand.u32 2147483647, %v430
    %v463 = vand.u32 2147483647, %v431
    %v464 = vand.u32 2147483647, %v432
    %v465 = vand.u32 2147483647, %v433
    %v466 = vand.u32 2147483647, %v434
    %v467 = vand.u32 2147483647, %v435
    %v468 = vand.u32 2147483647, %v436
    %v469 = vand.u32 2147483647, %v437
    %v470 = vand.u32 2147483647, %v438
    %v471 = vand.u32 2147483647, %v439
    %v472 = vand.u32 2147483647, %v440
    %v473 = vand.u32 2147483647, %v441
    %v474 = vand.u32 2147483647, %v442
    %v475 = vand.u32 2147483647, %v443
    %v476 = vand.u32 2147483647, %v444
    %v477 = vsub.f32 0.0, %v461
    %v478 = vsub.f32 0.0, %v462
    %v479 = vsub.f32 0.0, %v463
    %v480 = vsub.f32 0.0, %v464
    %v481 = vsub.f32 0.0, %v465
    %v482 = vsub.f32 0.0, %v466
    %v483 = vsub.f32 0.0, %v467
    %v484 = vsub.f32 0.0, %v468
    %v485 = vsub.f32 0.0, %v469
    %v486 = vsub.f32 0.0, %v470
    %v487 = vsub.f32 0.0, %v471
    %v488 = vsub.f32 0.0, %v472
    %v489 = vsub.f32 0.0, %v473
    %v490 = vsub.f32 0.0, %v474
    %v491 = vsub.f32 0.0, %v475
    %v492 = vsub.f32 0.0, %v476
    %v493 = vmul.f32 %v477, 1.442695
    %v494 = vpow.pop %v493
    %v495 = vmul.f32 %v478, 1.442695
    %v496 = vpow.pop %v495
    %v497 = vmul.f32 %v479, 1.442695
    %v498 = vpow.pop %v497
    %v499 = vmul.f32 %v480, 1.442695
    %v500 = vpow.pop %v499
    %v501 = vmul.f32 %v481, 1.442695
    %v502 = vpow.pop %v501
    %v503 = vmul.f32 %v482, 1.442695
    %v504 = vpow.pop %v503
    %v505 = vmul.f32 %v483, 1.442695
    %v506 = vpow.pop %v505
    %v507 = vmul.f32 %v484, 1.442695
    %v508 = vpow.pop %v507
    %v509 = vmul.f32 %v485, 1.442695
    %v510 = vpow.pop %v509
    %v511 = vmul.f32 %v486, 1.442695
    %v512 = vpow.pop %v511
    %v513 = vmul.f32 %v487, 1.442695
    %v514 = vpow.pop %v513
    %v515 = vmul.f32 %v488, 1.442695
    %v516 = vpow.pop %v515
    %v517 = vmul.f32 %v489, 1.442695
    %v518 = vpow.pop %v517
    %v519 = vmul.f32 %v490, 1.442695
    %v520 = vpow.pop %v519
    %v521 = vmul.f32 %v491, 1.442695
    %v522 = vpow.pop %v521
    %v523 = vmul.f32 %v492, 1.442695
    %v524 = vpow.pop %v523
    %v525 = vadd.f32 %v494, 1.0
    %v526 = vlog2.pop %v525
    %v527 = vmul.f32 %v526, 0.6931472
    %v528 = vmul.f32 -0.5, %v494
    %v529 = vadd.f32 %v528, 1.0
    %v530 = vmul.f32 %v529, %v494
    %v531 = vand.u32 2147483647, %v494
    %vm532 = vcmp.lt.f32.partialorder %v531, 0.0004427343
    %v533 = vsel %vm532, %v530, %v527
    %v534 = vadd.f32 %v496, 1.0
    %v535 = vlog2.pop %v534
    %v536 = vmul.f32 %v535, 0.6931472
    %v537 = vmul.f32 -0.5, %v496
    %v538 = vadd.f32 %v537, 1.0
    %v539 = vmul.f32 %v538, %v496
    %v540 = vand.u32 2147483647, %v496
    %vm541 = vcmp.lt.f32.partialorder %v540, 0.0004427343
    %v542 = vsel %vm541, %v539, %v536
    %v543 = vadd.f32 %v498, 1.0
    %v544 = vlog2.pop %v543
    %v545 = vmul.f32 %v544, 0.6931472
    %v546 = vmul.f32 -0.5, %v498
    %v547 = vadd.f32 %v546, 1.0
    %v548 = vmul.f32 %v547, %v498
    %v549 = vand.u32 2147483647, %v498
    %vm550 = vcmp.lt.f32.partialorder %v549, 0.0004427343
    %v551 = vsel %vm550, %v548, %v545
    %v552 = vadd.f32 %v500, 1.0
    %v553 = vlog2.pop %v552
    %v554 = vmul.f32 %v553, 0.6931472
    %v555 = vmul.f32 -0.5, %v500
    %v556 = vadd.f32 %v555, 1.0
    %v557 = vmul.f32 %v556, %v500
    %v558 = vand.u32 2147483647, %v500
    %vm559 = vcmp.lt.f32.partialorder %v558, 0.0004427343
    %v560 = vsel %vm559, %v557, %v554
    %v561 = vadd.f32 %v502, 1.0
    %v562 = vlog2.pop %v561
    %v563 = vmul.f32 %v562, 0.6931472
    %v564 = vmul.f32 -0.5, %v502
    %v565 = vadd.f32 %v564, 1.0
    %v566 = vmul.f32 %v565, %v502
    %v567 = vand.u32 2147483647, %v502
    %vm568 = vcmp.lt.f32.partialorder %v567, 0.0004427343
    %v569 = vsel %vm568, %v566, %v563
    %v570 = vadd.f32 %v504, 1.0
    %v571 = vlog2.pop %v570
    %v572 = vmul.f32 %v571, 0.6931472
    %v573 = vmul.f32 -0.5, %v504
    %v574 = vadd.f32 %v573, 1.0
    %v575 = vmul.f32 %v574, %v504
    %v576 = vand.u32 2147483647, %v504
    %vm577 = vcmp.lt.f32.partialorder %v576, 0.0004427343
    %v578 = vsel %vm577, %v575, %v572
    %v579 = vadd.f32 %v506, 1.0
    %v580 = vlog2.pop %v579
    %v581 = vmul.f32 %v580, 0.6931472
    %v582 = vmul.f32 -0.5, %v506
    %v583 = vadd.f32 %v582, 1.0
    %v584 = vmul.f32 %v583, %v506
    %v585 = vand.u32 2147483647, %v506
    %vm586 = vcmp.lt.f32.partialorder %v585, 0.0004427343
    %v587 = vsel %vm586, %v584, %v581
    %v588 = vadd.f32 %v508, 1.0
    %v589 = vlog2.pop %v588
    %v590 = vmul.f32 %v589, 0.6931472
    %v591 = vmul.f32 -0.5, %v508
    %v592 = vadd.f32 %v591, 1.0
    %v593 = vmul.f32 %v592, %v508
    %v594 = vand.u32 2147483647, %v508
    %vm595 = vcmp.lt.f32.partialorder %v594, 0.0004427343
    %v596 = vsel %vm595, %v593, %v590
    %v597 = vadd.f32 %v510, 1.0
    %v598 = vlog2.pop %v597
    %v599 = vmul.f32 %v598, 0.6931472
    %v600 = vmul.f32 -0.5, %v510
    %v601 = vadd.f32 %v600, 1.0
    %v602 = vmul.f32 %v601, %v510
    %v603 = vand.u32 2147483647, %v510
    %vm604 = vcmp.lt.f32.partialorder %v603, 0.0004427343
    %v605 = vsel %vm604, %v602, %v599
    %v606 = vadd.f32 %v512, 1.0
    %v607 = vlog2.pop %v606
    %v608 = vmul.f32 %v607, 0.6931472
    %v609 = vmul.f32 -0.5, %v512
    %v610 = vadd.f32 %v609, 1.0
    %v611 = vmul.f32 %v610, %v512
    %v612 = vand.u32 2147483647, %v512
    %vm613 = vcmp.lt.f32.partialorder %v612, 0.0004427343
    %v614 = vsel %vm613, %v611, %v608
    %v615 = vadd.f32 %v514, 1.0
    %v616 = vlog2.pop %v615
    %v617 = vmul.f32 %v616, 0.6931472
    %v618 = vmul.f32 -0.5, %v514
    %v619 = vadd.f32 %v618, 1.0
    %v620 = vmul.f32 %v619, %v514
    %v621 = vand.u32 2147483647, %v514
    %vm622 = vcmp.lt.f32.partialorder %v621, 0.0004427343
    %v623 = vsel %vm622, %v620, %v617
    %v624 = vadd.f32 %v516, 1.0
    %v625 = vlog2.pop %v624
    %v626 = vmul.f32 %v625, 0.6931472
    %v627 = vmul.f32 -0.5, %v516
    %v628 = vadd.f32 %v627, 1.0
    %v629 = vmul.f32 %v628, %v516
    %v630 = vand.u32 2147483647, %v516
    %vm631 = vcmp.lt.f32.partialorder %v630, 0.0004427343
    %v632 = vsel %vm631, %v629, %v626
    %v633 = vadd.f32 %v518, 1.0
    %v634 = vlog2.pop %v633
    %v635 = vmul.f32 %v634, 0.6931472
    %v636 = vmul.f32 -0.5, %v518
    %v637 = vadd.f32 %v636, 1.0
    %v638 = vmul.f32 %v637, %v518
    %v639 = vand.u32 2147483647, %v518
    %vm640 = vcmp.lt.f32.partialorder %v639, 0.0004427343
    %v641 = vsel %vm640, %v638, %v635
    %v642 = vadd.f32 %v520, 1.0
    %v643 = vlog2.pop %v642
    %v644 = vmul.f32 %v643, 0.6931472
    %v645 = vmul.f32 -0.5, %v520
    %v646 = vadd.f32 %v645, 1.0
    %v647 = vmul.f32 %v646, %v520
    %v648 = vand.u32 2147483647, %v520
    %vm649 = vcmp.lt.f32.partialorder %v648, 0.0004427343
    %v650 = vsel %vm649, %v647, %v644
    %v651 = vadd.f32 %v522, 1.0
    %v652 = vlog2.pop %v651
    %v653 = vmul.f32 %v652, 0.6931472
    %v654 = vmul.f32 -0.5, %v522
    %v655 = vadd.f32 %v654, 1.0
    %v656 = vmul.f32 %v655, %v522
    %v657 = vand.u32 2147483647, %v522
    %vm658 = vcmp.lt.f32.partialorder %v657, 0.0004427343
    %v659 = vsel %vm658, %v656, %v653
    %v660 = vadd.f32 %v524, 1.0
    %v661 = vlog2.pop %v660
    %v662 = vmul.f32 %v661, 0.6931472
    %v663 = vmul.f32 -0.5, %v524
    %v664 = vadd.f32 %v663, 1.0
    %v665 = vmul.f32 %v664, %v524
    %v666 = vand.u32 2147483647, %v524
    %vm667 = vcmp.lt.f32.partialorder %v666, 0.0004427343
    %v668 = vsel %vm667, %v665, %v662
    %v669 = vsub.f32 %v445, %v533
    %v670 = vsub.f32 %v446, %v542
    %v671 = vsub.f32 %v447, %v551
    %v672 = vsub.f32 %v448, %v560
    %v673 = vsub.f32 %v449, %v569
    %v674 = vsub.f32 %v450, %v578
    %v675 = vsub.f32 %v451, %v587
    %v676 = vsub.f32 %v452, %v596
    %v677 = vsub.f32 %v453, %v605
    %v678 = vsub.f32 %v454, %v614
    %v679 = vsub.f32 %v455, %v623
    %v680 = vsub.f32 %v456, %v632
    %v681 = vsub.f32 %v457, %v641
    %v682 = vsub.f32 %v458, %v650
    %v683 = vsub.f32 %v459, %v659
    %v684 = vsub.f32 %v460, %v668
    %v685 = vld [vmem:[%s65] sm:$0xf]
    %v686 = vld [vmem:[%s65 + $0x4] sm:$0xf]
    %v687 = vld [vmem:[%s65 + $0x8] sm:$0xf]
    %v688 = vld [vmem:[%s65 + $0xc] sm:$0xf]
    %v689 = vld [vmem:[%s65 + $0x10] sm:$0xf]
    %v690 = vld [vmem:[%s65 + $0x14] sm:$0xf]
    %v691 = vld [vmem:[%s65 + $0x18] sm:$0xf]
    %v692 = vld [vmem:[%s65 + $0x1c] sm:$0xf]
    %v693 = vld [vmem:[%s65 + $0x20] sm:$0xf]
    %v694 = vld [vmem:[%s65 + $0x24] sm:$0xf]
    %v695 = vld [vmem:[%s65 + $0x28] sm:$0xf]
    %v696 = vld [vmem:[%s65 + $0x2c] sm:$0xf]
    %v697 = vld [vmem:[%s65 + $0x30] sm:$0xf]
    %v698 = vld [vmem:[%s65 + $0x34] sm:$0xf]
    %v699 = vld [vmem:[%s65 + $0x38] sm:$0xf]
    %v700 = vld [vmem:[%s65 + $0x3c] sm:$0xf]
    %v701 = vunpack.c.l.bf16 %v685
    %v702 = vunpack.c.l.bf16 %v686
    %v703 = vunpack.c.l.bf16 %v687
    %v704 = vunpack.c.l.bf16 %v688
    %v705 = vunpack.c.l.bf16 %v689
    %v706 = vunpack.c.l.bf16 %v690
    %v707 = vunpack.c.l.bf16 %v691
    %v708 = vunpack.c.l.bf16 %v692
    %v709 = vunpack.c.l.bf16 %v693
    %v710 = vunpack.c.l.bf16 %v694
    %v711 = vunpack.c.l.bf16 %v695
    %v712 = vunpack.c.l.bf16 %v696
    %v713 = vunpack.c.l.bf16 %v697
    %v714 = vunpack.c.l.bf16 %v698
    %v715 = vunpack.c.l.bf16 %v699
    %v716 = vunpack.c.l.bf16 %v700
    %v717 = vmul.f32 %v701, %v669
    %v718 = vmul.f32 %v702, %v670
    %v719 = vmul.f32 %v703, %v671
    %v720 = vmul.f32 %v704, %v672
    %v721 = vmul.f32 %v705, %v673
    %v722 = vmul.f32 %v706, %v674
    %v723 = vmul.f32 %v707, %v675
    %v724 = vmul.f32 %v708, %v676
    %v725 = vmul.f32 %v709, %v677
    %v726 = vmul.f32 %v710, %v678
    %v727 = vmul.f32 %v711, %v679
    %v728 = vmul.f32 %v712, %v680
    %v729 = vmul.f32 %v713, %v681
    %v730 = vmul.f32 %v714, %v682
    %v731 = vmul.f32 %v715, %v683
    %v732 = vmul.f32 %v716, %v684
    %v733 = vsub.f32 1.0, %v701
    %v734 = vsub.f32 1.0, %v702
    %v735 = vsub.f32 1.0, %v703
    %v736 = vsub.f32 1.0, %v704
    %v737 = vsub.f32 1.0, %v705
    %v738 = vsub.f32 1.0, %v706
    %v739 = vsub.f32 1.0, %v707
    %v740 = vsub.f32 1.0, %v708
    %v741 = vsub.f32 1.0, %v709
    %v742 = vsub.f32 1.0, %v710
    %v743 = vsub.f32 1.0, %v711
    %v744 = vsub.f32 1.0, %v712
    %v745 = vsub.f32 1.0, %v713
    %v746 = vsub.f32 1.0, %v714
    %v747 = vsub.f32 1.0, %v715
    %v748 = vsub.f32 1.0, %v716
    %v749 = vsub.f32 1.0, %v669
    %v750 = vsub.f32 1.0, %v670
    %v751 = vsub.f32 1.0, %v671
    %v752 = vsub.f32 1.0, %v672
    %v753 = vsub.f32 1.0, %v673
    %v754 = vsub.f32 1.0, %v674
    %v755 = vsub.f32 1.0, %v675
    %v756 = vsub.f32 1.0, %v676
    %v757 = vsub.f32 1.0, %v677
    %v758 = vsub.f32 1.0, %v678
    %v759 = vsub.f32 1.0, %v679
    %v760 = vsub.f32 1.0, %v680
    %v761 = vsub.f32 1.0, %v681
    %v762 = vsub.f32 1.0, %v682
    %v763 = vsub.f32 1.0, %v683
    %v764 = vsub.f32 1.0, %v684
    %v765 = vmul.f32 %v733, %v749
    %v766 = vmul.f32 %v734, %v750
    %v767 = vmul.f32 %v735, %v751
    %v768 = vmul.f32 %v736, %v752
    %v769 = vmul.f32 %v737, %v753
    %v770 = vmul.f32 %v738, %v754
    %v771 = vmul.f32 %v739, %v755
    %v772 = vmul.f32 %v740, %v756
    %v773 = vmul.f32 %v741, %v757
    %v774 = vmul.f32 %v742, %v758
    %v775 = vmul.f32 %v743, %v759
    %v776 = vmul.f32 %v744, %v760
    %v777 = vmul.f32 %v745, %v761
    %v778 = vmul.f32 %v746, %v762
    %v779 = vmul.f32 %v747, %v763
    %v780 = vmul.f32 %v748, %v764
    %v781 = vadd.f32 %v717, %v765
    %v782 = vadd.f32 %v718, %v766
    %v783 = vadd.f32 %v719, %v767
    %v784 = vadd.f32 %v720, %v768
    %v785 = vadd.f32 %v721, %v769
    %v786 = vadd.f32 %v722, %v770
    %v787 = vadd.f32 %v723, %v771
    %v788 = vadd.f32 %v724, %v772
    %v789 = vadd.f32 %v725, %v773
    %v790 = vadd.f32 %v726, %v774
    %v791 = vadd.f32 %v727, %v775
    %v792 = vadd.f32 %v728, %v776
    %v793 = vadd.f32 %v729, %v777
    %v794 = vadd.f32 %v730, %v778
    %v795 = vadd.f32 %v731, %v779
    %v796 = vadd.f32 %v732, %v780
    %v797 = vlaneseq
    %v798 = vand.u32 %v797, 127
    %s799 = smul.u32 %s86, 128
    %v800 = vstv %s799
    %v801 = vadd.s32 %v798, %v800
    %vm802 = vcmp.lt.s32.totalorder %v801, 16
    %v803 = vsel %vm802, 1, 0
    %vm804 = vcmp.eq.s32.totalorder %v803, 1
    %v805 = vsel %vm804, %v781, 0.0
    %v806 = vsel %vm804, %v782, 0.0
    %v807 = vsel %vm804, %v783, 0.0
    %v808 = vsel %vm804, %v784, 0.0
    %v809 = vsel %vm804, %v785, 0.0
    %v810 = vsel %vm804, %v786, 0.0
    %v811 = vsel %vm804, %v787, 0.0
    %v812 = vsel %vm804, %v788, 0.0
    %v813 = vsel %vm804, %v789, 0.0
    %v814 = vsel %vm804, %v790, 0.0
    %v815 = vsel %vm804, %v791, 0.0
    %v816 = vsel %vm804, %v792, 0.0
    %v817 = vsel %vm804, %v793, 0.0
    %v818 = vsel %vm804, %v794, 0.0
    %v819 = vsel %vm804, %v795, 0.0
    %v820 = vsel %vm804, %v796, 0.0
    %v821 = vld [vmem:[%s5] sm:$0xff]
    %v822 = vld [vmem:[%s5 + $0x8] sm:$0xff]
    %v823 = vld [vmem:[%s5 + $0x10] sm:$0xff]
    %v824 = vld [vmem:[%s5 + $0x18] sm:$0xff]
    %v825 = vld [vmem:[%s5 + $0x20] sm:$0xff]
    %v826 = vld [vmem:[%s5 + $0x28] sm:$0xff]
    %v827 = vld [vmem:[%s5 + $0x30] sm:$0xff]
    %v828 = vld [vmem:[%s5 + $0x38] sm:$0xff]
    %v829 = vld [vmem:[%s5 + $0x40] sm:$0xff]
    %v830 = vld [vmem:[%s5 + $0x48] sm:$0xff]
    %v831 = vld [vmem:[%s5 + $0x50] sm:$0xff]
    %v832 = vld [vmem:[%s5 + $0x58] sm:$0xff]
    %v833 = vld [vmem:[%s5 + $0x60] sm:$0xff]
    %v834 = vld [vmem:[%s5 + $0x68] sm:$0xff]
    %v835 = vld [vmem:[%s5 + $0x70] sm:$0xff]
    %v836 = vld [vmem:[%s5 + $0x78] sm:$0xff]
    %837 = vadd.xlane.f32.xlu0 %v805
    %v838 = vpop.xlane.xlu0 %837
    %839 = vadd.xlane.f32.xlu0 %v806
    %v840 = vpop.xlane.xlu0 %839
    %841 = vadd.xlane.f32.xlu0 %v807
    %v842 = vpop.xlane.xlu0 %841
    %843 = vadd.xlane.f32.xlu0 %v808
    %v844 = vpop.xlane.xlu0 %843
    %845 = vadd.xlane.f32.xlu0 %v809
    %v846 = vpop.xlane.xlu0 %845
    %847 = vadd.xlane.f32.xlu0 %v810
    %v848 = vpop.xlane.xlu0 %847
    %849 = vadd.xlane.f32.xlu0 %v811
    %v850 = vpop.xlane.xlu0 %849
    %851 = vadd.xlane.f32.xlu0 %v812
    %v852 = vpop.xlane.xlu0 %851
    %853 = vadd.xlane.f32.xlu0 %v813
    %v854 = vpop.xlane.xlu0 %853
    %855 = vadd.xlane.f32.xlu0 %v814
    %v856 = vpop.xlane.xlu0 %855
    %857 = vadd.xlane.f32.xlu0 %v815
    %v858 = vpop.xlane.xlu0 %857
    %859 = vadd.xlane.f32.xlu0 %v816
    %v860 = vpop.xlane.xlu0 %859
    %861 = vadd.xlane.f32.xlu0 %v817
    %v862 = vpop.xlane.xlu0 %861
    %863 = vadd.xlane.f32.xlu0 %v818
    %v864 = vpop.xlane.xlu0 %863
    %865 = vadd.xlane.f32.xlu0 %v819
    %v866 = vpop.xlane.xlu0 %865
    %867 = vadd.xlane.f32.xlu0 %v820
    %v868 = vpop.xlane.xlu0 %867
    %v869 = vadd.f32 %v821, %v838
    %v870 = vadd.f32 %v822, %v840
    %v871 = vadd.f32 %v823, %v842
    %v872 = vadd.f32 %v824, %v844
    %v873 = vadd.f32 %v825, %v846
    %v874 = vadd.f32 %v826, %v848
    %v875 = vadd.f32 %v827, %v850
    %v876 = vadd.f32 %v828, %v852
    %v877 = vadd.f32 %v829, %v854
    %v878 = vadd.f32 %v830, %v856
    %v879 = vadd.f32 %v831, %v858
    %v880 = vadd.f32 %v832, %v860
    %v881 = vadd.f32 %v833, %v862
    %v882 = vadd.f32 %v834, %v864
    %v883 = vadd.f32 %v835, %v866
    %v884 = vadd.f32 %v836, %v868
    %vm885 = vcmask 7168
    %886 = vst.msk [vmem:[%s5] sm:$0xff] %vm885, %v869
    %887 = vst.msk [vmem:[%s5 + $0x8] sm:$0xff] %vm885, %v870
    %888 = vst.msk [vmem:[%s5 + $0x10] sm:$0xff] %vm885, %v871
    %889 = vst.msk [vmem:[%s5 + $0x18] sm:$0xff] %vm885, %v872
    %890 = vst.msk [vmem:[%s5 + $0x20] sm:$0xff] %vm885, %v873
    %891 = vst.msk [vmem:[%s5 + $0x28] sm:$0xff] %vm885, %v874
    %892 = vst.msk [vmem:[%s5 + $0x30] sm:$0xff] %vm885, %v875
    %893 = vst.msk [vmem:[%s5 + $0x38] sm:$0xff] %vm885, %v876
    %894 = vst.msk [vmem:[%s5 + $0x40] sm:$0xff] %vm885, %v877
    %895 = vst.msk [vmem:[%s5 + $0x48] sm:$0xff] %vm885, %v878
    %896 = vst.msk [vmem:[%s5 + $0x50] sm:$0xff] %vm885, %v879
    %897 = vst.msk [vmem:[%s5 + $0x58] sm:$0xff] %vm885, %v880
    %898 = vst.msk [vmem:[%s5 + $0x60] sm:$0xff] %vm885, %v881
    %899 = vst.msk [vmem:[%s5 + $0x68] sm:$0xff] %vm885, %v882
    %900 = vst.msk [vmem:[%s5 + $0x70] sm:$0xff] %vm885, %v883
    %901 = vst.msk [vmem:[%s5 + $0x78] sm:$0xff] %vm885, %v884
  $region25: #{fvsbn_forward.1} parent=0 // pred_fallthru
    _
  // Predicated region
  $region26: #{fvsbn_forward.1} parent=0 // pred_check
    _
  $region27: #{fvsbn_forward.1} parent=0 // pred_check_branch
    %903 = sbr.rel (0) target = $region29
  $region28: #{fvsbn_forward.1} parent=0 // pred_region
    _
  $region29: #{fvsbn_forward.1} parent=0 // pred_fallthru
    _
  // Predicated region
  $region30: #{fvsbn_forward.1} parent=0 // pred_check
    _
  $region31: #{fvsbn_forward.1} parent=0 // pred_check_branch
    %905 = sbr.rel (0) target = $region33
  $region32: #{fvsbn_forward.1} parent=0 // pred_region
    _
  $region33: #{fvsbn_forward.1} parent=0 // pred_fallthru
    _

</llo_original>
